<compile_context>
chip_gen: v7x
topology: tpu7x:2x2x1
jax: 0.10.0
libtpu: 0.0.40
codegen_flags: <defaults>
</compile_context>

<pallas_src>
import math

import jax
import jax.numpy as jnp
from jax.experimental import pallas as pl
from jax.experimental.pallas import tpu as pltpu


# ----------------------------------------------------------------------------
# Parameter construction (init-time, host side — mirrors get_embedding())
# ----------------------------------------------------------------------------

def get_embedding(num_embeddings, embedding_dim):
    """Sinusoidal embeddings, matching the tensor2tensor/PyTorch reference."""
    half_dim = embedding_dim // 2
    emb = math.log(10000.0) / (half_dim - 1)
    emb = jnp.exp(jnp.arange(half_dim, dtype=jnp.float32) * -emb)
    emb = jnp.arange(num_embeddings, dtype=jnp.float32)[:, None] * emb[None, :]
    emb = jnp.concatenate([jnp.sin(emb), jnp.cos(emb)], axis=1)
    emb = emb.reshape(num_embeddings, -1)
    if embedding_dim % 2 == 1:
        emb = jnp.concatenate([emb, jnp.zeros((num_embeddings, 1), jnp.float32)],
                              axis=1)
    return emb


def init_pe(hidden_size, max_len=5000, pos_norm=False, dtype=jnp.float32):
    """Builds self.pe ([1, max_len, hidden]); pos_norm handled at init.

    Build in the activation dtype (e.g. bf16) to avoid a per-call cast.
    """
    pe = get_embedding(max_len, hidden_size)
    if pos_norm:
        pe = pe / pe.sum(axis=-1, keepdims=True)
    return pe[None, :, :].astype(dtype)


# ----------------------------------------------------------------------------
# Pallas kernel
# ----------------------------------------------------------------------------

def _add_pe_kernel(x_ref, pe_ref, o_ref):
    # x/o blocks: (TB, TL, Hl); pe block: (1, TL, Hl) — broadcast over batch.
    # Pure VPU elementwise add; lane dim = Hl (lane-dense by construction).
    o_ref[...] = x_ref[...] + pe_ref[...]


_TARGET_BLOCK_BYTES = 2 * 1024 * 1024  # ~2 MiB/block -> 6 live buffers ~12 MiB


def _row_tile(n_rows, row_bytes):
    """Row tile sized by bytes (~2 MiB), multiple of 8, or full extent."""
    if n_rows <= 8:
        return n_rows                       # full-extent (single tiny block)
    t = max(8, (_TARGET_BLOCK_BYTES // max(row_bytes, 1)) // 8 * 8)
    if t >= n_rows:
        return n_rows                       # whole row axis fits the budget
    return t                                # partial tail block is masked


def absolute_position_embedding(inp, pe, donate_input=False):
    """inp: [B, L, H]; pe: [1, max_len, H] with max_len >= L  ->  [B, L, H].

    Output dtype == inp.dtype (pe is cast to the activation dtype).
    """
    B, L, H = inp.shape
    assert pe.shape[0] == 1 and pe.shape[2] == H and pe.shape[1] >= L

    dtype = inp.dtype
    itemsize = jnp.dtype(dtype).itemsize

    # Match pe dtype to the activations (halves table DMA for bf16). Prefer
    # building pe in the right dtype at init; this cast is only a fallback.
    if pe.dtype != dtype:
        pe = pe.astype(dtype)

    # Lane-dense layout: if H is not a multiple of 128 but L*H is, fold the
    # trailing dims so the lane dimension is exactly 128.
    fold = (H % 128 != 0) and ((L * H) % 128 == 0) and (L * H >= 128)
    if fold:
        Hl = 128
        R = (L * H) // 128
        x2 = inp.reshape(B, R, Hl)
        # Folding mixes L and H, so pe must be sliced to L rows here.
        pe2 = pe[:, :L, :].reshape(1, R, Hl)
    else:
        Hl = H
        R = L
        x2 = inp
        pe2 = pe  # full table; index_map only touches the rows the grid needs

    row_bytes = Hl * itemsize
    TL = _row_tile(R, row_bytes)
    n_l = pl.cdiv(R, TL)

    # Widen the batch block when the whole row axis fits one small block, to
    # amortize per-grid-step overhead (pe block stays (1, TL, Hl) = resident).
    TB = 1
    if n_l == 1 and B > 1:
        blk_bytes = TL * row_bytes
        TB = int(min(B, max(1, _TARGET_BLOCK_BYTES // max(blk_bytes, 1))))
    n_b = pl.cdiv(B, TB)

    # v7x megacore: make sure there are >= 2 programs along a parallel axis
    # whenever the row axis is big enough to split.
    if n_l * n_b == 1 and R >= 16:
        TL = max(8, (TL // 2) // 8 * 8)
        n_l = pl.cdiv(R, TL)

    out = pl.pallas_call(
        _add_pe_kernel,
        out_shape=jax.ShapeDtypeStruct((B, R, Hl), dtype),
        grid=(n_l, n_b),
        in_specs=[
            # activations: streamed, double-buffered
            pl.BlockSpec((TB, TL, Hl), lambda j, b: (b, j, 0)),
            # pe tile: constant across inner batch axis -> stays resident
            pl.BlockSpec((1, TL, Hl), lambda j, b: (0, j, 0)),
        ],
        out_specs=pl.BlockSpec((TB, TL, Hl), lambda j, b: (b, j, 0)),
        compiler_params=pltpu.CompilerParams(
            dimension_semantics=("parallel", "parallel")),
        input_output_aliases=({0: 0} if donate_input else {}),
    )(x2, pe2)

    return out.reshape(B, L, H) if fold else out


# ----------------------------------------------------------------------------
# Pure-JAX reference (mirrors the PyTorch forward)
# ----------------------------------------------------------------------------

def reference_forward(inp, pe):
    return inp + pe[:, : inp.shape[1]].astype(inp.dtype)


# ----------------------------------------------------------------------------

if __name__ == "__main__":
    rng = jax.random.PRNGKey(0)
    k1, k2, k3 = jax.random.split(rng, 3)

    # 1) Small primary test (shapes implied by the module: [batch, seq, hidden]);
    #    H=32 exercises the lane-dense fold path.
    B, L, H, MAXLEN = 2, 8, 32, 5000
    pe = init_pe(H, max_len=MAXLEN, pos_norm=False)
    x = jax.random.normal(k1, (B, L, H), jnp.float32)
    out = jax.block_until_ready(absolute_position_embedding(x, pe))
    ref = reference_forward(x, pe)
    assert out.shape == (B, L, H)
    assert bool(jnp.allclose(out, ref, atol=1e-6, rtol=1e-6)), "mismatch (fold)"

    # 2) Ragged sequence length (L not a multiple of 8/tile) exercises the
    #    cdiv tiling + masked partial tail block path.
    B2, L2, H2 = 2, 300, 128
    x2 = jax.random.normal(k2, (B2, L2, H2), jnp.float32)
    pe2 = init_pe(H2, max_len=512, pos_norm=False)
    out2 = jax.block_until_ready(absolute_position_embedding(x2, pe2))
    ref2 = reference_forward(x2, pe2)
    assert bool(jnp.allclose(out2, ref2, atol=1e-6, rtol=1e-6)), "mismatch (ragged)"

    # 3) bf16 activations with an f32 table exercises the dtype-matching path.
    B3, L3, H3 = 2, 64, 256
    x3 = jax.random.normal(k3, (B3, L3, H3), jnp.float32).astype(jnp.bfloat16)
    pe3 = init_pe(H3, max_len=128, pos_norm=False)   # f32 table, cast in wrapper
    out3 = jax.block_until_ready(absolute_position_embedding(x3, pe3))
    ref3 = reference_forward(x3, pe3)
    assert out3.dtype == jnp.bfloat16
    assert bool(jnp.allclose(out3.astype(jnp.float32), ref3.astype(jnp.float32),
                             atol=2e-2, rtol=2e-2)), "mismatch (bf16)"

    print("KERNEL_OK")
</pallas_src>

<mosaic_0001>
module attributes {stable_mosaic.version = 11 : i64} {
  func.func @_add_pe_kernel(%arg0: i32, %arg1: i32, %arg2: memref<2x2x128xf32, #tpu.memory_space<vmem>>, %arg3: memref<1x2x128xf32, #tpu.memory_space<vmem>>, %arg4: memref<2x2x128xf32, #tpu.memory_space<vmem>>) attributes {dimension_semantics = [#tpu.dimension_semantics<parallel>, #tpu.dimension_semantics<parallel>], iteration_bounds = array<i64: 1, 1>, scalar_prefetch = 0 : i64, scratch_operands = 0 : i64, tpu.core_type = #tpu.core_type<tc>, window_params = [{transform_indices = @transform_0, window_bounds = array<i64: 2, 2, 128>}, {transform_indices = @transform_1, window_bounds = array<i64: 1, 2, 128>}, {transform_indices = @transform_2, window_bounds = array<i64: 2, 2, 128>}]} {
    %c0 = arith.constant 0 : index
    %c0_0 = arith.constant 0 : index
    %c0_1 = arith.constant 0 : index
    %0 = vector.load %arg2[%c0, %c0_0, %c0_1] : memref<2x2x128xf32, #tpu.memory_space<vmem>>, vector<2x2x128xf32>
    %c0_2 = arith.constant 0 : index
    %c0_3 = arith.constant 0 : index
    %c0_4 = arith.constant 0 : index
    %1 = vector.load %arg3[%c0_2, %c0_3, %c0_4] : memref<1x2x128xf32, #tpu.memory_space<vmem>>, vector<1x2x128xf32>
    %2 = vector.broadcast %1 : vector<1x2x128xf32> to vector<2x2x128xf32>
    %3 = arith.addf %0, %2 : vector<2x2x128xf32>
    %c0_5 = arith.constant 0 : index
    %c0_6 = arith.constant 0 : index
    %c0_7 = arith.constant 0 : index
    %4 = vector.load %arg4[%c0_5, %c0_6, %c0_7] : memref<2x2x128xf32, #tpu.memory_space<vmem>>, vector<2x2x128xf32>
    tpu.vector_store %arg4[%c0_5, %c0_6, %c0_7], %3 {strides = array<i32>} : memref<2x2x128xf32, #tpu.memory_space<vmem>>, vector<2x2x128xf32>,
    return
  }
  func.func @transform_0(%arg0: i32, %arg1: i32) -> (i32, i32, i32) {
    %c0_i32 = arith.constant 0 : i32
    %c0_i32_0 = arith.constant 0 : i32
    return %arg1, %arg0, %c0_i32 : i32, i32, i32
  }
  func.func @transform_1(%arg0: i32, %arg1: i32) -> (i32, i32, i32) {
    %c0_i32 = arith.constant 0 : i32
    %c0_i32_0 = arith.constant 0 : i32
    %c0_i32_1 = arith.constant 0 : i32
    return %c0_i32, %arg0, %c0_i32_0 : i32, i32, i32
  }
  func.func @transform_2(%arg0: i32, %arg1: i32) -> (i32, i32, i32) {
    %c0_i32 = arith.constant 0 : i32
    %c0_i32_0 = arith.constant 0 : i32
    return %arg1, %arg0, %c0_i32 : i32, i32, i32
  }
}

</mosaic_0001>

<llo_original>
// kernel: tpu_custom_call.1
$region0: #{tpu_custom_call.1}
  #allocation0 [shape = 'u32[]', space=smem, size = 0x4, offset = 0x4, fixed_abs, tag = 'smem constant byte address 0x4 - core index']
  #allocation1 [shape = 'u32[144,128]{1,0:T(1,128)}', space=vmem, size = 0x12000, scoped, tag = 'internal scratch']
  %s0 = inlined_call_operand.hbm [shape: f32[2,2,128], index: 0, kind: input, shape index: {}]
  %s1 = inlined_call_operand.vmem [shape: f32[1,2,128], index: 1, kind: input, shape index: {}]
  %s2 = inlined_call_operand.hbm [shape: f32[2,2,128], index: 2, kind: output, shape index: {}]
  %s3 = sld [smem:[#allocation0]]
  $region22: #{tpu_custom_call.1} parent=0
    _
  %s5 = ssub.s32 1, %s3
  %s6 = scalar_select 0, %s5, %s3
  $region1: #{tpu_custom_call.1} parent=0
    #allocation2 [shape = 'u8[2048]{0}', space=vmem, size = 0x800, scoped, tag = 'input window, operand 0, single buffered']
    #allocation3 [shape = 's32[1]{0}', space=sflag, size = 0x4, scoped, tag = 'scoped memory for tpu_custom_call.1']
    #allocation4 [shape = 's32[1]{0}', space=sflag, size = 0x4, scoped, tag = 'scoped memory for tpu_custom_call.1']
    #allocation5 [shape = 'u8[2048]{0}', space=vmem, size = 0x800, scoped, tag = 'output window, operand 0, single buffered']
    %7 = vsyncpa [#allocation3], 0
    %8 = vsyncpa [#allocation4], 0
    // Predicated region
    $region2: #{tpu_custom_call.1} parent=1 // pred_check
      _
    $region3: #{tpu_custom_call.1} parent=1 // pred_check_branch
      %10 = sbr.rel (0) target = $region5
    $region4: #{tpu_custom_call.1} parent=1 // pred_region
      %s12 = ssub.s32 64, 64
      %13 = vsyncadd [#allocation3], %s12
      %s14 = sshll.u32 [#allocation2], 4
      %s15 = int_to_ptr.vmem [resolvable:$true] %s14
      %20 = dma.hbm_to_vmem [thread:$0]  %s0, 64, %s15, [#allocation3], 32, 32, 2
    $region5: #{tpu_custom_call.1} parent=1 // pred_fallthru
      _
    // Predicated region
    $region6: #{tpu_custom_call.1} parent=1 // pred_check
      _
    $region7: #{tpu_custom_call.1} parent=1 // pred_check_branch
      %22 = sbr.rel (0) target = $region9
    $region8: #{tpu_custom_call.1} parent=1 // pred_region
      _
    $region9: #{tpu_custom_call.1} parent=1 // pred_fallthru
      _
    // Predicated region
    $region10: #{tpu_custom_call.1} parent=1 // pred_check
      _
    $region11: #{tpu_custom_call.1} parent=1 // pred_check_branch
      %24 = sbr.rel (0) target = $region13
    $region12: #{tpu_custom_call.1} parent=1 // pred_region
      %25 = dma.done [#allocation3], 64
    $region13: #{tpu_custom_call.1} parent=1 // pred_fallthru
      _
    %v26 = vld [vmem:[#allocation2] sm:$0x3]
    %v27 = vld [vmem:[#allocation2 + $0x2] sm:$0x3]
    %v28 = vld [vmem:[%s1] sm:$0x3]
    %v29 = vadd.f32 %v26, %v28
    %v30 = vadd.f32 %v27, %v28
    %31 = vst [vmem:[#allocation5] sm:$0x3] %v29
    %32 = vst [vmem:[#allocation5 + $0x2] sm:$0x3] %v30
    // Predicated region
    $region14: #{tpu_custom_call.1} parent=1 // pred_check
      _
    $region15: #{tpu_custom_call.1} parent=1 // pred_check_branch
      %34 = sbr.rel (0) target = $region17
    $region16: #{tpu_custom_call.1} parent=1 // pred_region
      %s36 = ssub.s32 64, 64
      %37 = vsyncadd [#allocation4], %s36
      %s38 = sshll.u32 [#allocation5], 4
      %s39 = int_to_ptr.vmem [resolvable:$true] %s38
      %44 = dma.vmem_to_hbm [thread:$0]  %s39, 64, %s2, [#allocation4], 32, 32, 2
    $region17: #{tpu_custom_call.1} parent=1 // pred_fallthru
      _
    // Predicated region
    $region18: #{tpu_custom_call.1} parent=1 // pred_check
      _
    $region19: #{tpu_custom_call.1} parent=1 // pred_check_branch
      %46 = sbr.rel (0) target = $region21
    $region20: #{tpu_custom_call.1} parent=1 // pred_region
      %47 = dma.done [#allocation4], 64
    $region21: #{tpu_custom_call.1} parent=1 // pred_fallthru
      _
    %48 = vsyncpa [#allocation3], 1
    %49 = vsyncpa [#allocation4], 1

</llo_original>
